<compile_context>
chip_gen: v5e
topology: v5e:2x2
jax: 0.10.0
libtpu: 0.0.40
codegen_flags: <defaults>
</compile_context>

<pallas_src>
import jax
import jax.numpy as jnp
from jax.experimental import pallas as pl
from jax.experimental.pallas import tpu as pltpu


_SUBLANE = 16  # sublane granularity safe for both f32 (8) and packed bf16 (16)


def _round_up(x, m):
    return (x + m - 1) // m * m


def _choose_tile_m(M, tile_m):
    """Pick the row-tile: big (amortize ~0.35us/step), but >=2 grid steps when
    there is enough work so both v7x TensorCores get fed."""
    m_aln = _round_up(M, _SUBLANE)
    tile = max(_SUBLANE, min(_round_up(tile_m, _SUBLANE), m_aln))
    if tile >= m_aln and m_aln >= 2 * _SUBLANE:
        tile = _round_up(m_aln // 2, _SUBLANE)
    return tile


# ----------------------------------------------------------------------------
# Kernel body: proj matmul + 2 highway layers on one row-tile.
# ----------------------------------------------------------------------------
def bidaf_embed_kernel(x_ref, wproj_ref,
                       w0_ref, b0_ref,     # fused [gate | transform] layer 0
                       w1_ref, b1_ref,     # fused [gate | transform] layer 1
                       out_ref):
    dh = out_ref.shape[-1]                 # padded hidden dim (multiple of 128)

    # proj: Linear(d_word -> d_hidden, bias=False); f32 MXU accumulation.
    h = jnp.dot(x_ref[...], wproj_ref[...], preferred_element_type=jnp.float32)

    def highway(h, w_ref, b_ref):
        gt = jnp.dot(h.astype(w_ref.dtype), w_ref[...],
                     preferred_element_type=jnp.float32) + b_ref[...]
        # sigmoid(x) == 0.5*(tanh(0.5*x)+1): 1 EUP transcendental instead of 2.
        g = 0.5 * (jnp.tanh(0.5 * gt[:, :dh]) + 1.0)
        t = jax.nn.relu(gt[:, dh:])
        return h + g * (t - h)             # == g*t + (1-g)*h

    h = highway(h, w0_ref, b0_ref)
    h = highway(h, w1_ref, b1_ref)
    out_ref[...] = h.astype(out_ref.dtype)


# ----------------------------------------------------------------------------
# One-time weight preparation (padding / fusion / dtype cast).  Call once and
# reuse across forward calls — keeps all per-parameter passes off the hot path.
# ----------------------------------------------------------------------------
def prepare_bidaf_params(word_vectors, w_proj_t, wt_t, bt, wg_t, bg, *,
                         compute_dtype=jnp.bfloat16):
    """word_vectors: (n_words, d_word) embedding table
       w_proj_t:     (d_word, d_hidden)               proj weight, pre-transposed
       wt_t, wg_t:   2 x (d_hidden, d_hidden)         highway weights, pre-transposed
       bt, bg:       2 x (d_hidden,)                  highway biases
       compute_dtype: MXU operand dtype (bf16 recommended on all generations;
                      f32 matches PyTorch numerics)."""
    d_word = word_vectors.shape[1]
    d_hidden = w_proj_t.shape[1]
    d_word_p = _round_up(d_word, 128)
    d_hidden_p = _round_up(d_hidden, 128)

    # Lane-align + cast the table once (zero feature columns contribute 0).
    table = word_vectors
    if d_word_p != d_word:
        table = jnp.pad(table, ((0, 0), (0, d_word_p - d_word)))
    table = table.astype(compute_dtype)

    w_proj = jnp.pad(w_proj_t, ((0, d_word_p - d_word),
                                (0, d_hidden_p - d_hidden))).astype(compute_dtype)

    def pad_hh(w):
        return jnp.pad(w, ((0, d_hidden_p - d_hidden), (0, d_hidden_p - d_hidden)))

    def pad_b(b):
        return jnp.pad(b, (0, d_hidden_p - d_hidden))

    # Fused [gate | transform] weights per layer: one (dh_p, 2*dh_p) matmul.
    w0 = jnp.concatenate([pad_hh(wg_t[0]), pad_hh(wt_t[0])], axis=1).astype(compute_dtype)
    w1 = jnp.concatenate([pad_hh(wg_t[1]), pad_hh(wt_t[1])], axis=1).astype(compute_dtype)
    b0 = jnp.concatenate([pad_b(bg[0]), pad_b(bt[0])]
                         ).reshape(1, 2 * d_hidden_p).astype(jnp.float32)
    b1 = jnp.concatenate([pad_b(bg[1]), pad_b(bt[1])]
                         ).reshape(1, 2 * d_hidden_p).astype(jnp.float32)

    return dict(table=table, w_proj=w_proj, w0=w0, b0=b0, w1=w1, b1=b1,
                d_hidden=d_hidden, d_hidden_p=d_hidden_p, d_word_p=d_word_p)


# ----------------------------------------------------------------------------
# Forward pass.
# ----------------------------------------------------------------------------
def bidaf_embedding(x_w, params, *, tile_m=512, out_dtype=jnp.float32):
    """x_w: (B, S) int32 word indices.  Returns (B, S, d_hidden) in out_dtype."""
    B, S = x_w.shape
    M = B * S
    d_hidden = params["d_hidden"]
    dh_p = params["d_hidden_p"]
    dw_p = params["d_word_p"]

    tile = _choose_tile_m(M, tile_m)
    M_p = _round_up(M, tile)

    # Pad the *indices* (cheap, int32), never the (M, d_word) activations.
    idx = x_w.reshape(-1).astype(jnp.int32)
    if M_p != M:
        idx = jnp.pad(idx, (0, M_p - M))            # 0 is a valid row index

    # Embedding gather (glue, plain XLA) — emits x_word directly in its final
    # padded layout and compute dtype: a single HBM write, no extra passes.
    x_word = jnp.take(params["table"], idx, axis=0)  # (M_p, dw_p)

    # Weights/biases: constant index_maps => DMA once, buffers stay resident.
    full = lambda r, c: pl.BlockSpec((r, c), lambda i: (0, 0))

    out = pl.pallas_call(
        bidaf_embed_kernel,
        out_shape=jax.ShapeDtypeStruct((M_p, dh_p), out_dtype),
        grid_spec=pltpu.PrefetchScalarGridSpec(
            num_scalar_prefetch=0,
            grid=(M_p // tile,),
            in_specs=[
                pl.BlockSpec((tile, dw_p), lambda i: (i, 0)),    # x tile
                full(dw_p, dh_p),                                # w_proj
                full(dh_p, 2 * dh_p), full(1, 2 * dh_p),         # w0, b0
                full(dh_p, 2 * dh_p), full(1, 2 * dh_p),         # w1, b1
            ],
            out_specs=pl.BlockSpec((tile, dh_p), lambda i: (i, 0)),
        ),
        compiler_params=pltpu.CompilerParams(
            dimension_semantics=("parallel",)),
    )(x_word, params["w_proj"], params["w0"], params["b0"],
      params["w1"], params["b1"])

    out = out[:M, :d_hidden]          # drop row / hidden-dim padding
    return out.reshape(B, S, d_hidden)


# ----------------------------------------------------------------------------
# Pure-JAX reference (mirrors the PyTorch module, eval mode).
# ----------------------------------------------------------------------------
def _reference(x_w, word_vectors, w_proj_t, wt_t, bt, wg_t, bg):
    x = jnp.take(word_vectors, x_w.reshape(-1), axis=0)
    h = x @ w_proj_t
    for l in range(2):
        g = jax.nn.sigmoid(h @ wg_t[l] + bg[l])
        t = jax.nn.relu(h @ wt_t[l] + bt[l])
        h = g * t + (1.0 - g) * h
    return h.reshape(x_w.shape[0], x_w.shape[1], -1)


def _make_params(key, n_words, d_word, d_hidden):
    ks = jax.random.split(key, 9)
    word_vectors = jax.random.normal(ks[0], (n_words, d_word), jnp.float32) * 0.1
    w_proj_t = jax.random.normal(ks[1], (d_word, d_hidden), jnp.float32) * 0.05
    wt_t = [jax.random.normal(ks[2], (d_hidden, d_hidden), jnp.float32) * 0.05,
            jax.random.normal(ks[3], (d_hidden, d_hidden), jnp.float32) * 0.05]
    wg_t = [jax.random.normal(ks[4], (d_hidden, d_hidden), jnp.float32) * 0.05,
            jax.random.normal(ks[5], (d_hidden, d_hidden), jnp.float32) * 0.05]
    bt = [jax.random.normal(ks[6], (d_hidden,), jnp.float32) * 0.05,
          jnp.zeros((d_hidden,), jnp.float32)]
    bg = [jax.random.normal(ks[7], (d_hidden,), jnp.float32) * 0.05,
          jnp.zeros((d_hidden,), jnp.float32)]
    return word_vectors, w_proj_t, wt_t, bt, wg_t, bg, ks[8]


if __name__ == "__main__":
    key = jax.random.PRNGKey(0)
    k1, k2 = jax.random.split(key)

    # ---- Case 1: aligned hidden dim (demo-sized) -------------------------
    B, S, n_words, d_word, d_hidden = 2, 8, 50, 64, 128
    wv, wp, wt_t, bt, wg_t, bg, kidx = _make_params(k1, n_words, d_word, d_hidden)
    x_w = jax.random.randint(kidx, (B, S), 0, n_words, dtype=jnp.int32)
    ref = _reference(x_w, wv, wp, wt_t, bt, wg_t, bg)

    # Exact f32 path — matches the PyTorch module numerics.
    p_f32 = prepare_bidaf_params(wv, wp, wt_t, bt, wg_t, bg,
                                 compute_dtype=jnp.float32)
    out = jax.block_until_ready(bidaf_embedding(x_w, p_f32))
    assert out.shape == (B, S, d_hidden)
    assert jnp.allclose(out, ref, atol=1e-5, rtol=1e-5)

    # Default bf16 matmul path (recommended on v5e/v6e/v7x), f32 output.
    p_bf16 = prepare_bidaf_params(wv, wp, wt_t, bt, wg_t, bg)
    out_bf16 = jax.block_until_ready(bidaf_embedding(x_w, p_bf16))
    assert jnp.allclose(out_bf16, ref, atol=5e-2, rtol=5e-2)

    # bf16 output storage (halves writeback when downstream accepts it).
    out_bf16_o = jax.block_until_ready(
        bidaf_embedding(x_w, p_bf16, out_dtype=jnp.bfloat16))
    assert out_bf16_o.dtype == jnp.bfloat16
    assert jnp.allclose(out_bf16_o.astype(jnp.float32), ref, atol=6e-2, rtol=6e-2)

    # ---- Case 2: real-BiDAF-like unaligned dims (d_hidden=100, M=150) ----
    # Exercises d_word/d_hidden lane padding and row-tile padding paths.
    B2, S2, n_words2, d_word2, d_hidden2 = 3, 50, 40, 96, 100
    wv2, wp2, wt2, bt2, wg2, bg2, kidx2 = _make_params(k2, n_words2, d_word2,
                                                       d_hidden2)
    x_w2 = jax.random.randint(kidx2, (B2, S2), 0, n_words2, dtype=jnp.int32)
    ref2 = _reference(x_w2, wv2, wp2, wt2, bt2, wg2, bg2)

    p2_f32 = prepare_bidaf_params(wv2, wp2, wt2, bt2, wg2, bg2,
                                  compute_dtype=jnp.float32)
    out2 = jax.block_until_ready(bidaf_embedding(x_w2, p2_f32))
    assert out2.shape == (B2, S2, d_hidden2)
    assert jnp.allclose(out2, ref2, atol=1e-5, rtol=1e-5)

    p2_bf16 = prepare_bidaf_params(wv2, wp2, wt2, bt2, wg2, bg2)
    out2_bf16 = jax.block_until_ready(bidaf_embedding(x_w2, p2_bf16))
    assert jnp.allclose(out2_bf16, ref2, atol=5e-2, rtol=5e-2)

    print("KERNEL_OK")
</pallas_src>

<mosaic_0001>
module attributes {stable_mosaic.version = 11 : i64} {
  func.func @bidaf_embed_kernel(%arg0: i32, %arg1: memref<16x128xf32, #tpu.memory_space<vmem>>, %arg2: memref<128x128xf32, #tpu.memory_space<vmem>>, %arg3: memref<128x256xf32, #tpu.memory_space<vmem>>, %arg4: memref<1x256xf32, #tpu.memory_space<vmem>>, %arg5: memref<128x256xf32, #tpu.memory_space<vmem>>, %arg6: memref<1x256xf32, #tpu.memory_space<vmem>>, %arg7: memref<16x128xf32, #tpu.memory_space<vmem>>) attributes {dimension_semantics = [#tpu.dimension_semantics<parallel>], iteration_bounds = array<i64: 1>, scalar_prefetch = 0 : i64, scratch_operands = 0 : i64, tpu.core_type = #tpu.core_type<tc>, window_params = [{transform_indices = @transform_0, window_bounds = array<i64: 16, 128>}, {pipeline_mode = #tpu.pipeline_mode<synchronous>, transform_indices = @transform_1, window_bounds = array<i64: 128, 128>}, {pipeline_mode = #tpu.pipeline_mode<synchronous>, transform_indices = @transform_2, window_bounds = array<i64: 128, 256>}, {pipeline_mode = #tpu.pipeline_mode<synchronous>, transform_indices = @transform_3, window_bounds = array<i64: 1, 256>}, {pipeline_mode = #tpu.pipeline_mode<synchronous>, transform_indices = @transform_4, window_bounds = array<i64: 128, 256>}, {pipeline_mode = #tpu.pipeline_mode<synchronous>, transform_indices = @transform_5, window_bounds = array<i64: 1, 256>}, {transform_indices = @transform_6, window_bounds = array<i64: 16, 128>}]} {
    %c0 = arith.constant 0 : index
    %c0_0 = arith.constant 0 : index
    %0 = vector.load %arg1[%c0, %c0_0] : memref<16x128xf32, #tpu.memory_space<vmem>>, vector<16x128xf32>
    %c0_1 = arith.constant 0 : index
    %c0_2 = arith.constant 0 : index
    %1 = vector.load %arg2[%c0_1, %c0_2] : memref<128x128xf32, #tpu.memory_space<vmem>>, vector<128x128xf32>
    %cst = arith.constant dense<0.000000e+00> : vector<16x128xf32>
    %2 = tpu.matmul %0, %1, %cst {dimension_numbers = #tpu.dot_dimension_numbers<[1], [0], [0], [1], [0, 0, 1, 1], [], []>} : vector<16x128xf32>, vector<128x128xf32>, vector<16x128xf32> -> vector<16x128xf32>
    %c0_3 = arith.constant 0 : index
    %c0_4 = arith.constant 0 : index
    %3 = vector.load %arg3[%c0_3, %c0_4] : memref<128x256xf32, #tpu.memory_space<vmem>>, vector<128x256xf32>
    %cst_5 = arith.constant dense<0.000000e+00> : vector<16x256xf32>
    %4 = tpu.matmul %2, %3, %cst_5 {dimension_numbers = #tpu.dot_dimension_numbers<[1], [0], [0], [1], [0, 0, 1, 1], [], []>} : vector<16x128xf32>, vector<128x256xf32>, vector<16x256xf32> -> vector<16x256xf32>
    %c0_6 = arith.constant 0 : index
    %c0_7 = arith.constant 0 : index
    %5 = vector.load %arg4[%c0_6, %c0_7] : memref<1x256xf32, #tpu.memory_space<vmem>>, vector<1x256xf32>
    %6 = vector.broadcast %5 : vector<1x256xf32> to vector<16x256xf32>
    %7 = arith.addf %4, %6 : vector<16x256xf32>
    %8 = vector.extract_strided_slice %7 {offsets = [0, 0], sizes = [16, 128], strides = [1, 1]} : vector<16x256xf32> to vector<16x128xf32>
    %cst_8 = arith.constant 5.000000e-01 : f32
    %9 = vector.broadcast %cst_8 : f32 to vector<16x128xf32>
    %10 = arith.mulf %9, %8 : vector<16x128xf32>
    %11 = math.tanh %10 : vector<16x128xf32>
    %cst_9 = arith.constant 1.000000e+00 : f32
    %12 = vector.broadcast %cst_9 : f32 to vector<16x128xf32>
    %13 = arith.addf %11, %12 : vector<16x128xf32>
    %cst_10 = arith.constant 5.000000e-01 : f32
    %14 = vector.broadcast %cst_10 : f32 to vector<16x128xf32>
    %15 = arith.mulf %14, %13 : vector<16x128xf32>
    %16 = vector.extract_strided_slice %7 {offsets = [0, 128], sizes = [16, 128], strides = [1, 1]} : vector<16x256xf32> to vector<16x128xf32>
    %cst_11 = arith.constant 0.000000e+00 : f32
    %17 = vector.broadcast %cst_11 : f32 to vector<16x128xf32>
    %18 = arith.maximumf %16, %17 : vector<16x128xf32>
    %19 = arith.subf %18, %2 : vector<16x128xf32>
    %20 = arith.mulf %15, %19 : vector<16x128xf32>
    %21 = arith.addf %2, %20 : vector<16x128xf32>
    %c0_12 = arith.constant 0 : index
    %c0_13 = arith.constant 0 : index
    %22 = vector.load %arg5[%c0_12, %c0_13] : memref<128x256xf32, #tpu.memory_space<vmem>>, vector<128x256xf32>
    %cst_14 = arith.constant dense<0.000000e+00> : vector<16x256xf32>
    %23 = tpu.matmul %21, %22, %cst_14 {dimension_numbers = #tpu.dot_dimension_numbers<[1], [0], [0], [1], [0, 0, 1, 1], [], []>} : vector<16x128xf32>, vector<128x256xf32>, vector<16x256xf32> -> vector<16x256xf32>
    %c0_15 = arith.constant 0 : index
    %c0_16 = arith.constant 0 : index
    %24 = vector.load %arg6[%c0_15, %c0_16] : memref<1x256xf32, #tpu.memory_space<vmem>>, vector<1x256xf32>
    %25 = vector.broadcast %24 : vector<1x256xf32> to vector<16x256xf32>
    %26 = arith.addf %23, %25 : vector<16x256xf32>
    %27 = vector.extract_strided_slice %26 {offsets = [0, 0], sizes = [16, 128], strides = [1, 1]} : vector<16x256xf32> to vector<16x128xf32>
    %cst_17 = arith.constant 5.000000e-01 : f32
    %28 = vector.broadcast %cst_17 : f32 to vector<16x128xf32>
    %29 = arith.mulf %28, %27 : vector<16x128xf32>
    %30 = math.tanh %29 : vector<16x128xf32>
    %cst_18 = arith.constant 1.000000e+00 : f32
    %31 = vector.broadcast %cst_18 : f32 to vector<16x128xf32>
    %32 = arith.addf %30, %31 : vector<16x128xf32>
    %cst_19 = arith.constant 5.000000e-01 : f32
    %33 = vector.broadcast %cst_19 : f32 to vector<16x128xf32>
    %34 = arith.mulf %33, %32 : vector<16x128xf32>
    %35 = vector.extract_strided_slice %26 {offsets = [0, 128], sizes = [16, 128], strides = [1, 1]} : vector<16x256xf32> to vector<16x128xf32>
    %cst_20 = arith.constant 0.000000e+00 : f32
    %36 = vector.broadcast %cst_20 : f32 to vector<16x128xf32>
    %37 = arith.maximumf %35, %36 : vector<16x128xf32>
    %38 = arith.subf %37, %21 : vector<16x128xf32>
    %39 = arith.mulf %34, %38 : vector<16x128xf32>
    %40 = arith.addf %21, %39 : vector<16x128xf32>
    %c0_21 = arith.constant 0 : index
    %c0_22 = arith.constant 0 : index
    %41 = vector.load %arg7[%c0_21, %c0_22] : memref<16x128xf32, #tpu.memory_space<vmem>>, vector<16x128xf32>
    tpu.vector_store %arg7[%c0_21, %c0_22], %40 {strides = array<i32>} : memref<16x128xf32, #tpu.memory_space<vmem>>, vector<16x128xf32>,
    return
  }
  func.func @transform_0(%arg0: i32) -> (i32, i32) {
    %c0_i32 = arith.constant 0 : i32
    %c0_i32_0 = arith.constant 0 : i32
    return %arg0, %c0_i32 : i32, i32
  }
  func.func @transform_1(%arg0: i32) -> (i32, i32) {
    %c0_i32 = arith.constant 0 : i32
    %c0_i32_0 = arith.constant 0 : i32
    %c0_i32_1 = arith.constant 0 : i32
    return %c0_i32, %c0_i32_0 : i32, i32
  }
  func.func @transform_2(%arg0: i32) -> (i32, i32) {
    %c0_i32 = arith.constant 0 : i32
    %c0_i32_0 = arith.constant 0 : i32
    %c0_i32_1 = arith.constant 0 : i32
    return %c0_i32, %c0_i32_0 : i32, i32
  }
  func.func @transform_3(%arg0: i32) -> (i32, i32) {
    %c0_i32 = arith.constant 0 : i32
    %c0_i32_0 = arith.constant 0 : i32
    %c0_i32_1 = arith.constant 0 : i32
    return %c0_i32, %c0_i32_0 : i32, i32
  }
  func.func @transform_4(%arg0: i32) -> (i32, i32) {
    %c0_i32 = arith.constant 0 : i32
    %c0_i32_0 = arith.constant 0 : i32
    %c0_i32_1 = arith.constant 0 : i32
    return %c0_i32, %c0_i32_0 : i32, i32
  }
  func.func @transform_5(%arg0: i32) -> (i32, i32) {
    %c0_i32 = arith.constant 0 : i32
    %c0_i32_0 = arith.constant 0 : i32
    %c0_i32_1 = arith.constant 0 : i32
    return %c0_i32, %c0_i32_0 : i32, i32
  }
  func.func @transform_6(%arg0: i32) -> (i32, i32) {
    %c0_i32 = arith.constant 0 : i32
    %c0_i32_0 = arith.constant 0 : i32
    return %arg0, %c0_i32 : i32, i32
  }
}

</mosaic_0001>

<llo_original>
// kernel: tpu_custom_call.1
$region0: #{tpu_custom_call.1}
  #allocation0 [shape = 'u32[]', space=smem, size = 0x4, offset = 0x4, fixed_abs, tag = 'smem constant byte address 0x4 - core index']
  #allocation1 [shape = 'u32[72,128]{1,0:T(1,128)}', space=vmem, size = 0x9000, scoped, tag = 'internal scratch']
  %s0 = inlined_call_operand.hbm [shape: f32[16,128], index: 0, kind: input, shape index: {}]
  %s1 = inlined_call_operand.hbm [shape: f32[128,128], index: 1, kind: input, shape index: {}]
  %s2 = inlined_call_operand.hbm [shape: f32[128,256], index: 2, kind: input, shape index: {}]
  %s3 = inlined_call_operand.vmem [shape: f32[1,256], index: 3, kind: input, shape index: {}]
  %s4 = inlined_call_operand.hbm [shape: f32[128,256], index: 4, kind: input, shape index: {}]
  %s5 = inlined_call_operand.vmem [shape: f32[1,256], index: 5, kind: input, shape index: {}]
  %s6 = inlined_call_operand.hbm [shape: f32[16,128], index: 6, kind: output, shape index: {}]
  %s7 = sld [smem:[#allocation0]]
  $region50: #{tpu_custom_call.1} parent=0
    _
  %s9 = ssub.s32 1, %s7
  %s10 = scalar_select 0, %s9, %s7
  $region1: #{tpu_custom_call.1} parent=0
    #allocation2 [shape = 'u8[8192]{0}', space=vmem, size = 0x2000, scoped, tag = 'input window, operand 0, single buffered']
    #allocation3 [shape = 's32[1]{0}', space=sflag, size = 0x4, scoped, tag = 'scoped memory for tpu_custom_call.1']
    #allocation4 [shape = 's32[1]{0}', space=sflag, size = 0x4, scoped, tag = 'scoped memory for tpu_custom_call.1']
    #allocation5 [shape = 'u8[65536]{0}', space=vmem, size = 0x10000, scoped, tag = 'input window, operand 1, single buffered']
    #allocation6 [shape = 's32[1]{0}', space=sflag, size = 0x4, scoped, tag = 'scoped memory for tpu_custom_call.1']
    #allocation7 [shape = 'u8[131072]{0}', space=vmem, size = 0x20000, scoped, tag = 'input window, operand 2, single buffered']
    #allocation8 [shape = 'u8[131072]{0}', space=vmem, size = 0x20000, scoped, tag = 'input window, operand 4, single buffered']
    #allocation9 [shape = 's32[1]{0}', space=sflag, size = 0x4, scoped, tag = 'scoped memory for tpu_custom_call.1']
    #allocation10 [shape = 'u8[8192]{0}', space=vmem, size = 0x2000, scoped, tag = 'output window, operand 0, single buffered']
    %11 = vsyncpa [#allocation3], 0
    %12 = vsyncpa [#allocation6], 0
    %13 = vsyncpa [#allocation9], 0
    %14 = vsyncpa [#allocation4], 0
    // Predicated region
    $region2: #{tpu_custom_call.1} parent=1 // pred_check
      _
    $region3: #{tpu_custom_call.1} parent=1 // pred_check_branch
      %16 = sbr.rel (0) target = $region5
    $region4: #{tpu_custom_call.1} parent=1 // pred_region
      %18 = vsyncadd [#allocation3], 0
      %s19 = sshll.u32 %s0, 4
      %s20 = int_to_ptr.hbm [resolvable:$true] %s19
      %s21 = sshll.u32 [#allocation2], 4
      %s22 = int_to_ptr.vmem [resolvable:$true] %s21
      %27 = dma.hbm_to_vmem [thread:$0]  %s20, 256, %s22, [#allocation3], 128, 128, 8
    $region5: #{tpu_custom_call.1} parent=1 // pred_fallthru
      _
    // Predicated region
    $region6: #{tpu_custom_call.1} parent=1 // pred_check
      _
    $region7: #{tpu_custom_call.1} parent=1 // pred_check_branch
      %29 = sbr.rel (0) target = $region9
    $region8: #{tpu_custom_call.1} parent=1 // pred_region
      %31 = vsyncadd [#allocation6], 0
      %s32 = sshll.u32 %s1, 4
      %s33 = int_to_ptr.hbm [resolvable:$true] %s32
      %s34 = sshll.u32 [#allocation5], 4
      %s35 = int_to_ptr.vmem [resolvable:$true] %s34
      %40 = dma.hbm_to_vmem [thread:$0]  %s33, 2048, %s35, [#allocation6], 128, 128, 8
    $region9: #{tpu_custom_call.1} parent=1 // pred_fallthru
      _
    // Predicated region
    $region10: #{tpu_custom_call.1} parent=1 // pred_check
      _
    $region11: #{tpu_custom_call.1} parent=1 // pred_check_branch
      %42 = sbr.rel (0) target = $region13
    $region12: #{tpu_custom_call.1} parent=1 // pred_region
      %44 = vsyncadd [#allocation6], 0
      %s45 = sshll.u32 %s2, 4
      %s46 = int_to_ptr.hbm [resolvable:$true] %s45
      %s47 = sshll.u32 [#allocation7], 4
      %s48 = int_to_ptr.vmem [resolvable:$true] %s47
      %53 = dma.hbm_to_vmem [thread:$0]  %s46, 4096, %s48, [#allocation6], 256, 256, 16
    $region13: #{tpu_custom_call.1} parent=1 // pred_fallthru
      _
    // Predicated region
    $region14: #{tpu_custom_call.1} parent=1 // pred_check
      _
    $region15: #{tpu_custom_call.1} parent=1 // pred_check_branch
      %55 = sbr.rel (0) target = $region17
    $region16: #{tpu_custom_call.1} parent=1 // pred_region
      _
    $region17: #{tpu_custom_call.1} parent=1 // pred_fallthru
      _
    // Predicated region
    $region18: #{tpu_custom_call.1} parent=1 // pred_check
      _
    $region19: #{tpu_custom_call.1} parent=1 // pred_check_branch
      %57 = sbr.rel (0) target = $region21
    $region20: #{tpu_custom_call.1} parent=1 // pred_region
      %59 = vsyncadd [#allocation9], 0
      %s60 = sshll.u32 %s4, 4
      %s61 = int_to_ptr.hbm [resolvable:$true] %s60
      %s62 = sshll.u32 [#allocation8], 4
      %s63 = int_to_ptr.vmem [resolvable:$true] %s62
      %68 = dma.hbm_to_vmem [thread:$0]  %s61, 4096, %s63, [#allocation9], 256, 256, 16
    $region21: #{tpu_custom_call.1} parent=1 // pred_fallthru
      _
    // Predicated region
    $region22: #{tpu_custom_call.1} parent=1 // pred_check
      _
    $region23: #{tpu_custom_call.1} parent=1 // pred_check_branch
      %70 = sbr.rel (0) target = $region25
    $region24: #{tpu_custom_call.1} parent=1 // pred_region
      _
    $region25: #{tpu_custom_call.1} parent=1 // pred_fallthru
      _
    // Predicated region
    $region26: #{tpu_custom_call.1} parent=1 // pred_check
      _
    $region27: #{tpu_custom_call.1} parent=1 // pred_check_branch
      %72 = sbr.rel (0) target = $region29
    $region28: #{tpu_custom_call.1} parent=1 // pred_region
      %74 = dma.done [#allocation3], 256
    $region29: #{tpu_custom_call.1} parent=1 // pred_fallthru
      _
    // Predicated region
    $region30: #{tpu_custom_call.1} parent=1 // pred_check
      _
    $region31: #{tpu_custom_call.1} parent=1 // pred_check_branch
      %76 = sbr.rel (0) target = $region33
    $region32: #{tpu_custom_call.1} parent=1 // pred_region
      %78 = dma.done [#allocation6], 2048
    $region33: #{tpu_custom_call.1} parent=1 // pred_fallthru
      _
    // Predicated region
    $region34: #{tpu_custom_call.1} parent=1 // pred_check
      _
    $region35: #{tpu_custom_call.1} parent=1 // pred_check_branch
      %80 = sbr.rel (0) target = $region37
    $region36: #{tpu_custom_call.1} parent=1 // pred_region
      %82 = dma.done [#allocation6], 4096
    $region37: #{tpu_custom_call.1} parent=1 // pred_fallthru
      _
    // Predicated region
    $region38: #{tpu_custom_call.1} parent=1 // pred_check
      _
    $region39: #{tpu_custom_call.1} parent=1 // pred_check_branch
      %84 = sbr.rel (0) target = $region41
    $region40: #{tpu_custom_call.1} parent=1 // pred_region
      %86 = dma.done [#allocation9], 4096
    $region41: #{tpu_custom_call.1} parent=1 // pred_fallthru
      _
    %v87 = vld [vmem:[#allocation2] sm:$0xff]
    %v88 = vld [vmem:[#allocation2 + $0x8] sm:$0xff]
    %v89 = vld [vmem:[#allocation5] sm:$0xff]
    %v90 = vld [vmem:[#allocation5 + $0x8] sm:$0xff]
    %v91 = vld [vmem:[#allocation5 + $0x10] sm:$0xff]
    %v92 = vld [vmem:[#allocation5 + $0x18] sm:$0xff]
    %v93 = vld [vmem:[#allocation5 + $0x20] sm:$0xff]
    %v94 = vld [vmem:[#allocation5 + $0x28] sm:$0xff]
    %v95 = vld [vmem:[#allocation5 + $0x30] sm:$0xff]
    %v96 = vld [vmem:[#allocation5 + $0x38] sm:$0xff]
    %v97 = vld [vmem:[#allocation5 + $0x40] sm:$0xff]
    %v98 = vld [vmem:[#allocation5 + $0x48] sm:$0xff]
    %v99 = vld [vmem:[#allocation5 + $0x50] sm:$0xff]
    %v100 = vld [vmem:[#allocation5 + $0x58] sm:$0xff]
    %v101 = vld [vmem:[#allocation5 + $0x60] sm:$0xff]
    %v102 = vld [vmem:[#allocation5 + $0x68] sm:$0xff]
    %v103 = vld [vmem:[#allocation5 + $0x70] sm:$0xff]
    %v104 = vld [vmem:[#allocation5 + $0x78] sm:$0xff]
    %105 = vmatpush.msra.mxu0 %v104
    %106 = vmatpush.msra.mxu0 %v103
    %107 = vmatpush.msra.mxu0 %v102
    %108 = vmatpush.msra.mxu0 %v101
    %109 = vmatpush.msra.mxu0 %v100
    %110 = vmatpush.msra.mxu0 %v99
    %111 = vmatpush.msra.mxu0 %v98
    %112 = vmatpush.msra.mxu0 %v97
    %113 = vmatpush.msra.mxu0 %v96
    %114 = vmatpush.msra.mxu0 %v95
    %115 = vmatpush.msra.mxu0 %v94
    %116 = vmatpush.msra.mxu0 %v93
    %117 = vmatpush.msra.mxu0 %v92
    %118 = vmatpush.msra.mxu0 %v91
    %119 = vmatpush.msra.mxu0 %v90
    %120 = vmatpush.msra.mxu0 %v89
    %121 = vmatmul.f32.gmra.mxu0 %v87
    %v122 = vpop.f32.mrf.mxu0
    %v123 = vadd.f32 0.0, %v122
    %124 = vmatmul.f32.gmra.mxu0 %v88
    %v125 = vpop.f32.mrf.mxu0
    %v126 = vadd.f32 0.0, %v125
    %127 = vdwg.mxu0
    %v128 = vld [vmem:[#allocation7] sm:$0xff]
    %v129 = vld [vmem:[#allocation7 + $0x8] sm:$0xff]
    %v130 = vld [vmem:[#allocation7 + $0x10] sm:$0xff]
    %v131 = vld [vmem:[#allocation7 + $0x18] sm:$0xff]
    %v132 = vld [vmem:[#allocation7 + $0x20] sm:$0xff]
    %v133 = vld [vmem:[#allocation7 + $0x28] sm:$0xff]
    %v134 = vld [vmem:[#allocation7 + $0x30] sm:$0xff]
    %v135 = vld [vmem:[#allocation7 + $0x38] sm:$0xff]
    %v136 = vld [vmem:[#allocation7 + $0x40] sm:$0xff]
    %v137 = vld [vmem:[#allocation7 + $0x48] sm:$0xff]
    %v138 = vld [vmem:[#allocation7 + $0x50] sm:$0xff]
    %v139 = vld [vmem:[#allocation7 + $0x58] sm:$0xff]
    %v140 = vld [vmem:[#allocation7 + $0x60] sm:$0xff]
    %v141 = vld [vmem:[#allocation7 + $0x68] sm:$0xff]
    %v142 = vld [vmem:[#allocation7 + $0x70] sm:$0xff]
    %v143 = vld [vmem:[#allocation7 + $0x78] sm:$0xff]
    %v144 = vld [vmem:[#allocation7 + $0x80] sm:$0xff]
    %v145 = vld [vmem:[#allocation7 + $0x88] sm:$0xff]
    %v146 = vld [vmem:[#allocation7 + $0x90] sm:$0xff]
    %v147 = vld [vmem:[#allocation7 + $0x98] sm:$0xff]
    %v148 = vld [vmem:[#allocation7 + $0xa0] sm:$0xff]
    %v149 = vld [vmem:[#allocation7 + $0xa8] sm:$0xff]
    %v150 = vld [vmem:[#allocation7 + $0xb0] sm:$0xff]
    %v151 = vld [vmem:[#allocation7 + $0xb8] sm:$0xff]
    %v152 = vld [vmem:[#allocation7 + $0xc0] sm:$0xff]
    %v153 = vld [vmem:[#allocation7 + $0xc8] sm:$0xff]
    %v154 = vld [vmem:[#allocation7 + $0xd0] sm:$0xff]
    %v155 = vld [vmem:[#allocation7 + $0xd8] sm:$0xff]
    %v156 = vld [vmem:[#allocation7 + $0xe0] sm:$0xff]
    %v157 = vld [vmem:[#allocation7 + $0xe8] sm:$0xff]
    %v158 = vld [vmem:[#allocation7 + $0xf0] sm:$0xff]
    %v159 = vld [vmem:[#allocation7 + $0xf8] sm:$0xff]
    %v160 = vld [vmem:[%s3] sm:$0x3]
    %v162 = vperm.slane %v160, 0
    %v163 = vperm.slane %v160, 1
    %166 = vmatpush.msra.mxu0 %v158
    %167 = vmatpush.msra.mxu0 %v156
    %168 = vmatpush.msra.mxu0 %v154
    %169 = vmatpush.msra.mxu0 %v152
    %170 = vmatpush.msra.mxu0 %v150
    %171 = vmatpush.msra.mxu0 %v148
    %172 = vmatpush.msra.mxu0 %v146
    %173 = vmatpush.msra.mxu0 %v144
    %174 = vmatpush.msra.mxu0 %v142
    %175 = vmatpush.msra.mxu0 %v140
    %176 = vmatpush.msra.mxu0 %v138
    %177 = vmatpush.msra.mxu0 %v136
    %178 = vmatpush.msra.mxu0 %v134
    %179 = vmatpush.msra.mxu0 %v132
    %180 = vmatpush.msra.mxu0 %v130
    %181 = vmatpush.msra.mxu0 %v128
    %182 = vmatmul.f32.gmra.mxu0 %v123
    %v183 = vpop.f32.mrf.mxu0
    %v184 = vadd.f32 %v162, %v183
    %185 = vmatmul.f32.gmra.mxu0 %v126
    %v186 = vpop.f32.mrf.mxu0
    %v187 = vadd.f32 %v162, %v186
    %188 = vdwg.mxu0
    %189 = vmatpush.msra.mxu0 %v159
    %190 = vmatpush.msra.mxu0 %v157
    %191 = vmatpush.msra.mxu0 %v155
    %192 = vmatpush.msra.mxu0 %v153
    %193 = vmatpush.msra.mxu0 %v151
    %194 = vmatpush.msra.mxu0 %v149
    %195 = vmatpush.msra.mxu0 %v147
    %196 = vmatpush.msra.mxu0 %v145
    %197 = vmatpush.msra.mxu0 %v143
    %198 = vmatpush.msra.mxu0 %v141
    %199 = vmatpush.msra.mxu0 %v139
    %200 = vmatpush.msra.mxu0 %v137
    %201 = vmatpush.msra.mxu0 %v135
    %202 = vmatpush.msra.mxu0 %v133
    %203 = vmatpush.msra.mxu0 %v131
    %204 = vmatpush.msra.mxu0 %v129
    %205 = vmatmul.f32.gmra.mxu0 %v123
    %v206 = vpop.f32.mrf.mxu0
    %v207 = vadd.f32 %v163, %v206
    %208 = vmatmul.f32.gmra.mxu0 %v126
    %v209 = vpop.f32.mrf.mxu0
    %v210 = vadd.f32 %v163, %v209
    %211 = vdwg.mxu0
    %v212 = vmul.f32 %v184, 0.5
    %v213 = vmul.f32 %v187, 0.5
    %v214 = vtanh.pop %v212
    %v215 = vtanh.pop %v213
    %v216 = vadd.f32 %v214, 1.0
    %v217 = vadd.f32 %v215, 1.0
    %v218 = vmul.f32 %v216, 0.5
    %v219 = vmul.f32 %v217, 0.5
    %v220 = vmax.f32 %v207, 0.0
    %v221 = vmax.f32 %v210, 0.0
    %v222 = vsub.f32 %v220, %v123
    %v223 = vsub.f32 %v221, %v126
    %v224 = vmul.f32 %v218, %v222
    %v225 = vmul.f32 %v219, %v223
    %v226 = vadd.f32 %v123, %v224
    %v227 = vadd.f32 %v126, %v225
    %v228 = vld [vmem:[#allocation8] sm:$0xff]
    %v229 = vld [vmem:[#allocation8 + $0x8] sm:$0xff]
    %v230 = vld [vmem:[#allocation8 + $0x10] sm:$0xff]
    %v231 = vld [vmem:[#allocation8 + $0x18] sm:$0xff]
    %v232 = vld [vmem:[#allocation8 + $0x20] sm:$0xff]
    %v233 = vld [vmem:[#allocation8 + $0x28] sm:$0xff]
    %v234 = vld [vmem:[#allocation8 + $0x30] sm:$0xff]
    %v235 = vld [vmem:[#allocation8 + $0x38] sm:$0xff]
    %v236 = vld [vmem:[#allocation8 + $0x40] sm:$0xff]
    %v237 = vld [vmem:[#allocation8 + $0x48] sm:$0xff]
    %v238 = vld [vmem:[#allocation8 + $0x50] sm:$0xff]
    %v239 = vld [vmem:[#allocation8 + $0x58] sm:$0xff]
    %v240 = vld [vmem:[#allocation8 + $0x60] sm:$0xff]
    %v241 = vld [vmem:[#allocation8 + $0x68] sm:$0xff]
    %v242 = vld [vmem:[#allocation8 + $0x70] sm:$0xff]
    %v243 = vld [vmem:[#allocation8 + $0x78] sm:$0xff]
    %v244 = vld [vmem:[#allocation8 + $0x80] sm:$0xff]
    %v245 = vld [vmem:[#allocation8 + $0x88] sm:$0xff]
    %v246 = vld [vmem:[#allocation8 + $0x90] sm:$0xff]
    %v247 = vld [vmem:[#allocation8 + $0x98] sm:$0xff]
    %v248 = vld [vmem:[#allocation8 + $0xa0] sm:$0xff]
    %v249 = vld [vmem:[#allocation8 + $0xa8] sm:$0xff]
    %v250 = vld [vmem:[#allocation8 + $0xb0] sm:$0xff]
    %v251 = vld [vmem:[#allocation8 + $0xb8] sm:$0xff]
    %v252 = vld [vmem:[#allocation8 + $0xc0] sm:$0xff]
    %v253 = vld [vmem:[#allocation8 + $0xc8] sm:$0xff]
    %v254 = vld [vmem:[#allocation8 + $0xd0] sm:$0xff]
    %v255 = vld [vmem:[#allocation8 + $0xd8] sm:$0xff]
    %v256 = vld [vmem:[#allocation8 + $0xe0] sm:$0xff]
    %v257 = vld [vmem:[#allocation8 + $0xe8] sm:$0xff]
    %v258 = vld [vmem:[#allocation8 + $0xf0] sm:$0xff]
    %v259 = vld [vmem:[#allocation8 + $0xf8] sm:$0xff]
    %v260 = vld [vmem:[%s5] sm:$0x3]
    %v262 = vperm.slane %v260, 0
    %v263 = vperm.slane %v260, 1
    %266 = vmatpush.msra.mxu0 %v258
    %267 = vmatpush.msra.mxu0 %v256
    %268 = vmatpush.msra.mxu0 %v254
    %269 = vmatpush.msra.mxu0 %v252
    %270 = vmatpush.msra.mxu0 %v250
    %271 = vmatpush.msra.mxu0 %v248
    %272 = vmatpush.msra.mxu0 %v246
    %273 = vmatpush.msra.mxu0 %v244
    %274 = vmatpush.msra.mxu0 %v242
    %275 = vmatpush.msra.mxu0 %v240
    %276 = vmatpush.msra.mxu0 %v238
    %277 = vmatpush.msra.mxu0 %v236
    %278 = vmatpush.msra.mxu0 %v234
    %279 = vmatpush.msra.mxu0 %v232
    %280 = vmatpush.msra.mxu0 %v230
    %281 = vmatpush.msra.mxu0 %v228
    %282 = vmatmul.f32.gmra.mxu0 %v226
    %v283 = vpop.f32.mrf.mxu0
    %v284 = vadd.f32 %v262, %v283
    %285 = vmatmul.f32.gmra.mxu0 %v227
    %v286 = vpop.f32.mrf.mxu0
    %v287 = vadd.f32 %v262, %v286
    %288 = vdwg.mxu0
    %289 = vmatpush.msra.mxu0 %v259
    %290 = vmatpush.msra.mxu0 %v257
    %291 = vmatpush.msra.mxu0 %v255
    %292 = vmatpush.msra.mxu0 %v253
    %293 = vmatpush.msra.mxu0 %v251
    %294 = vmatpush.msra.mxu0 %v249
    %295 = vmatpush.msra.mxu0 %v247
    %296 = vmatpush.msra.mxu0 %v245
    %297 = vmatpush.msra.mxu0 %v243
    %298 = vmatpush.msra.mxu0 %v241
    %299 = vmatpush.msra.mxu0 %v239
    %300 = vmatpush.msra.mxu0 %v237
    %301 = vmatpush.msra.mxu0 %v235
    %302 = vmatpush.msra.mxu0 %v233
    %303 = vmatpush.msra.mxu0 %v231
    %304 = vmatpush.msra.mxu0 %v229
    %305 = vmatmul.f32.gmra.mxu0 %v226
    %v306 = vpop.f32.mrf.mxu0
    %v307 = vadd.f32 %v263, %v306
    %308 = vmatmul.f32.gmra.mxu0 %v227
    %v309 = vpop.f32.mrf.mxu0
    %v310 = vadd.f32 %v263, %v309
    %311 = vdwg.mxu0
    %v312 = vmul.f32 %v284, 0.5
    %v313 = vmul.f32 %v287, 0.5
    %v314 = vtanh.pop %v312
    %v315 = vtanh.pop %v313
    %v316 = vadd.f32 %v314, 1.0
    %v317 = vadd.f32 %v315, 1.0
    %v318 = vmul.f32 %v316, 0.5
    %v319 = vmul.f32 %v317, 0.5
    %v320 = vmax.f32 %v307, 0.0
    %v321 = vmax.f32 %v310, 0.0
    %v322 = vsub.f32 %v320, %v226
    %v323 = vsub.f32 %v321, %v227
    %v324 = vmul.f32 %v318, %v322
    %v325 = vmul.f32 %v319, %v323
    %v326 = vadd.f32 %v226, %v324
    %v327 = vadd.f32 %v227, %v325
    %328 = vst [vmem:[#allocation10] sm:$0xff] %v326
    %329 = vst [vmem:[#allocation10 + $0x8] sm:$0xff] %v327
    // Predicated region
    $region42: #{tpu_custom_call.1} parent=1 // pred_check
      _
    $region43: #{tpu_custom_call.1} parent=1 // pred_check_branch
      %331 = sbr.rel (0) target = $region45
    $region44: #{tpu_custom_call.1} parent=1 // pred_region
      %333 = vsyncadd [#allocation4], 0
      %s334 = sshll.u32 [#allocation10], 4
      %s335 = int_to_ptr.vmem [resolvable:$true] %s334
      %s336 = sshll.u32 %s6, 4
      %s337 = int_to_ptr.hbm [resolvable:$true] %s336
      %342 = dma.vmem_to_hbm [thread:$0]  %s335, 256, %s337, [#allocation4], 128, 128, 8
    $region45: #{tpu_custom_call.1} parent=1 // pred_fallthru
      _
    // Predicated region
    $region46: #{tpu_custom_call.1} parent=1 // pred_check
      _
    $region47: #{tpu_custom_call.1} parent=1 // pred_check_branch
      %344 = sbr.rel (0) target = $region49
    $region48: #{tpu_custom_call.1} parent=1 // pred_region
      %346 = dma.done [#allocation4], 256
    $region49: #{tpu_custom_call.1} parent=1 // pred_fallthru
      _
    %347 = vsyncpa [#allocation3], 1
    %348 = vsyncpa [#allocation6], 1
    %349 = vsyncpa [#allocation9], 1
    %350 = vsyncpa [#allocation4], 1

</llo_original>
